<compile_context>
chip_gen: v7x
topology: tpu7x:2x2x1
jax: 0.10.0
libtpu: 0.0.40
codegen_flags: <defaults>
</compile_context>

<pallas_src>
import functools

import jax
import jax.numpy as jnp
from jax.experimental import pallas as pl
from jax.experimental.pallas import tpu as pltpu


def _gelu_tanh(x):
    # TODO(synk): PyTorch F.gelu defaults to the exact erf formulation; the tanh
    # approximation is used here (Mosaic-safe transcendentals), max dev ~3e-3.
    c = 0.7978845608028654  # sqrt(2/pi)
    return 0.5 * x * (1.0 + jnp.tanh(c * (x + 0.044715 * x * x * x)))


def _channel_feature_mixer_kernel(
    x_ref,        # (1, C, N)  raw input slab for this batch element (N = P*D)
    mavg_ref,     # (N, N)     block-diagonal averaging matrix (1/D per d_model group)
    gamma_ref,    # (1, N)     LayerNorm weight, tiled over patches
    beta_ref,     # (1, N)     LayerNorm bias, tiled over patches
    wa_ref,       # (C, C)     gated-attention weight
    ba_ref,       # (C, 1)     gated-attention bias
    w1_ref,       # (H, C)     MLP fc1 weight
    b1_ref,       # (H, 1)     MLP fc1 bias
    w2_ref,       # (C, H)     MLP fc2 weight
    b2_ref,       # (C, 1)     MLP fc2 bias
    out_ref,      # (1, C, N)
    *,
    eps,
):
    x = x_ref[0]                       # (C, N) -- also the residual
    mavg = mavg_ref[...]               # (N, N)

    # --- LayerNorm over d_model (per (channel, patch) group of D lanes). ---
    mean = jnp.dot(x, mavg, preferred_element_type=jnp.float32)         # (C, N)
    cen = x - mean
    var = jnp.dot(cen * cen, mavg, preferred_element_type=jnp.float32)  # (C, N)
    xn = cen * jax.lax.rsqrt(var + eps) * gamma_ref[...] + beta_ref[...]

    # --- Gated attention over the channel axis (sublane axis here). ---
    logits = jnp.dot(wa_ref[...], xn, preferred_element_type=jnp.float32) + ba_ref[...]
    logits = logits - jnp.max(logits, axis=0, keepdims=True)
    e = jnp.exp(logits)
    attn = e / jnp.sum(e, axis=0, keepdims=True)
    g = xn * attn

    # --- Channel MLP: fc1 -> gelu -> fc2 (dropout is identity at inference). ---
    h = jnp.dot(w1_ref[...], g, preferred_element_type=jnp.float32) + b1_ref[...]
    h = _gelu_tanh(h)
    y = jnp.dot(w2_ref[...], h, preferred_element_type=jnp.float32) + b2_ref[...]

    # Residual add; output slab is lane-dense (last dim = P*D).
    out_ref[0] = (y + x).astype(out_ref.dtype)


def channel_feature_mixer_block(x, params, *, eps=1e-5):
    """Pallas implementation of PatchTSMixerVAEChannelFeatureMixerBlock.forward.

    Args:
        x: (B, C, P, D) = (batch, num_input_channels, num_patches, d_model).
        params: dict with ln_weight/ln_bias (D,), attn_weight (C,C),
            attn_bias (C,), fc1_weight (H,C), fc1_bias (H,), fc2_weight (C,H),
            fc2_bias (C,), where H = C * expansion_factor.
    Returns:
        (B, C, P, D) array, same semantics as the PyTorch module in eval mode.
    """
    B, C, P, D = x.shape
    N = P * D
    dtype = x.dtype

    gamma, beta = params["ln_weight"], params["ln_bias"]
    wa, ba = params["attn_weight"], params["attn_bias"]
    w1, b1 = params["fc1_weight"], params["fc1_bias"]
    w2, b2 = params["fc2_weight"], params["fc2_bias"]
    H = w1.shape[0]

    # Wrapper-side layout plumbing (pure XLA reshapes / tiles, no extra copies
    # inside the kernel).
    x2d = x.reshape(B, C, N)
    seg = jnp.arange(N, dtype=jnp.int32) // D
    mavg = (seg[:, None] == seg[None, :]).astype(dtype) * (1.0 / D)   # (N, N)
    gamma_pd = jnp.tile(gamma.astype(dtype), P).reshape(1, N)
    beta_pd = jnp.tile(beta.astype(dtype), P).reshape(1, N)

    kernel = functools.partial(_channel_feature_mixer_kernel, eps=float(eps))

    out2d = pl.pallas_call(
        kernel,
        out_shape=jax.ShapeDtypeStruct((B, C, N), dtype),
        grid=(B,),
        in_specs=[
            pl.BlockSpec((1, C, N), lambda b: (b, 0, 0)),   # input slab
            pl.BlockSpec((N, N), lambda b: (0, 0)),          # averaging matrix
            pl.BlockSpec((1, N), lambda b: (0, 0)),          # LN gamma (tiled)
            pl.BlockSpec((1, N), lambda b: (0, 0)),          # LN beta  (tiled)
            pl.BlockSpec((C, C), lambda b: (0, 0)),          # attn weight
            pl.BlockSpec((C, 1), lambda b: (0, 0)),          # attn bias
            pl.BlockSpec((H, C), lambda b: (0, 0)),          # fc1 weight
            pl.BlockSpec((H, 1), lambda b: (0, 0)),          # fc1 bias
            pl.BlockSpec((C, H), lambda b: (0, 0)),          # fc2 weight
            pl.BlockSpec((C, 1), lambda b: (0, 0)),          # fc2 bias
        ],
        out_specs=pl.BlockSpec((1, C, N), lambda b: (b, 0, 0)),
        compiler_params=pltpu.CompilerParams(
            dimension_semantics=("parallel",),
        ),
    )(
        x2d, mavg, gamma_pd, beta_pd,
        wa.astype(dtype), ba.astype(dtype).reshape(C, 1),
        w1.astype(dtype), b1.astype(dtype).reshape(H, 1),
        w2.astype(dtype), b2.astype(dtype).reshape(C, 1),
    )
    return out2d.reshape(B, C, P, D)


def reference_forward(x, params, *, eps=1e-5):
    """Pure-JAX reference mirroring the PyTorch module (eval mode)."""
    gamma, beta = params["ln_weight"], params["ln_bias"]
    wa, ba = params["attn_weight"], params["attn_bias"]
    w1, b1 = params["fc1_weight"], params["fc1_bias"]
    w2, b2 = params["fc2_weight"], params["fc2_bias"]

    residual = x
    mean = jnp.mean(x, axis=-1, keepdims=True)
    var = jnp.mean((x - mean) ** 2, axis=-1, keepdims=True)
    xn = (x - mean) / jnp.sqrt(var + eps) * gamma + beta

    xp = jnp.transpose(xn, (0, 3, 2, 1))                       # (B, D, P, C)
    logits = jnp.einsum("bdpc,jc->bdpj", xp, wa) + ba
    attn = jax.nn.softmax(logits, axis=-1)
    gp = xp * attn
    h = _gelu_tanh(jnp.einsum("bdpc,kc->bdpk", gp, w1) + b1)
    y = jnp.einsum("bdpk,jk->bdpj", h, w2) + b2
    y = jnp.transpose(y, (0, 3, 2, 1))                         # (B, C, P, D)
    return y + residual


if __name__ == "__main__":
    # Small shapes consistent with the module:
    # (batch, num_input_channels, num_patches, d_model), expansion_factor = 2.
    B, C, P, D = 2, 4, 8, 32
    H = 2 * C

    key = jax.random.PRNGKey(0)
    ks = jax.random.split(key, 9)
    x = jax.random.normal(ks[0], (B, C, P, D), dtype=jnp.float32)
    params = {
        "ln_weight": 1.0 + 0.1 * jax.random.normal(ks[1], (D,), jnp.float32),
        "ln_bias": 0.1 * jax.random.normal(ks[2], (D,), jnp.float32),
        "attn_weight": 0.3 * jax.random.normal(ks[3], (C, C), jnp.float32),
        "attn_bias": 0.1 * jax.random.normal(ks[4], (C,), jnp.float32),
        "fc1_weight": 0.3 * jax.random.normal(ks[5], (H, C), jnp.float32),
        "fc1_bias": 0.1 * jax.random.normal(ks[6], (H,), jnp.float32),
        "fc2_weight": 0.3 * jax.random.normal(ks[7], (C, H), jnp.float32),
        "fc2_bias": 0.1 * jax.random.normal(ks[8], (C,), jnp.float32),
    }

    out = channel_feature_mixer_block(x, params)
    jax.block_until_ready(out)

    ref = reference_forward(x, params)
    assert out.shape == (B, C, P, D)
    max_err = float(jnp.max(jnp.abs(out - ref)))
    # Loose-ish tolerance to stay robust to MXU f32 (bf16-pass) matmul rounding.
    assert jnp.allclose(out, ref, atol=2e-2, rtol=2e-2), max_err

    print("KERNEL_OK")
</pallas_src>

<mosaic_0001>
module attributes {stable_mosaic.version = 11 : i64} {
  func.func @_channel_feature_mixer_kernel(%arg0: i32, %arg1: memref<1x4x256xf32, #tpu.memory_space<vmem>>, %arg2: memref<256x256xf32, #tpu.memory_space<vmem>>, %arg3: memref<1x256xf32, #tpu.memory_space<vmem>>, %arg4: memref<1x256xf32, #tpu.memory_space<vmem>>, %arg5: memref<4x4xf32, #tpu.memory_space<vmem>>, %arg6: memref<4x1xf32, #tpu.memory_space<vmem>>, %arg7: memref<8x4xf32, #tpu.memory_space<vmem>>, %arg8: memref<8x1xf32, #tpu.memory_space<vmem>>, %arg9: memref<4x8xf32, #tpu.memory_space<vmem>>, %arg10: memref<4x1xf32, #tpu.memory_space<vmem>>, %arg11: memref<1x4x256xf32, #tpu.memory_space<vmem>>) attributes {dimension_semantics = [#tpu.dimension_semantics<parallel>], iteration_bounds = array<i64: 2>, scalar_prefetch = 0 : i64, scratch_operands = 0 : i64, tpu.core_type = #tpu.core_type<tc>, window_params = [{transform_indices = @transform_0, window_bounds = array<i64: 1, 4, 256>}, {pipeline_mode = #tpu.pipeline_mode<synchronous>, transform_indices = @transform_1, window_bounds = array<i64: 256, 256>}, {pipeline_mode = #tpu.pipeline_mode<synchronous>, transform_indices = @transform_2, window_bounds = array<i64: 1, 256>}, {pipeline_mode = #tpu.pipeline_mode<synchronous>, transform_indices = @transform_3, window_bounds = array<i64: 1, 256>}, {pipeline_mode = #tpu.pipeline_mode<synchronous>, transform_indices = @transform_4, window_bounds = array<i64: 4, 4>}, {pipeline_mode = #tpu.pipeline_mode<synchronous>, transform_indices = @transform_5, window_bounds = array<i64: 4, 1>}, {pipeline_mode = #tpu.pipeline_mode<synchronous>, transform_indices = @transform_6, window_bounds = array<i64: 8, 4>}, {pipeline_mode = #tpu.pipeline_mode<synchronous>, transform_indices = @transform_7, window_bounds = array<i64: 8, 1>}, {pipeline_mode = #tpu.pipeline_mode<synchronous>, transform_indices = @transform_8, window_bounds = array<i64: 4, 8>}, {pipeline_mode = #tpu.pipeline_mode<synchronous>, transform_indices = @transform_9, window_bounds = array<i64: 4, 1>}, {transform_indices = @transform_10, window_bounds = array<i64: 1, 4, 256>}]} {
    %c0 = arith.constant 0 : index
    %c0_0 = arith.constant 0 : index
    %c0_1 = arith.constant 0 : index
    %0 = vector.load %arg1[%c0, %c0_0, %c0_1] : memref<1x4x256xf32, #tpu.memory_space<vmem>>, vector<1x4x256xf32>
    %1 = vector.shape_cast %0 : vector<1x4x256xf32> to vector<4x256xf32>
    %c0_2 = arith.constant 0 : index
    %c0_3 = arith.constant 0 : index
    %2 = vector.load %arg2[%c0_2, %c0_3] : memref<256x256xf32, #tpu.memory_space<vmem>>, vector<256x256xf32>
    %cst = arith.constant dense<0.000000e+00> : vector<4x256xf32>
    %3 = tpu.matmul %1, %2, %cst {dimension_numbers = #tpu.dot_dimension_numbers<[1], [0], [0], [1], [0, 0, 1, 1], [], []>} : vector<4x256xf32>, vector<256x256xf32>, vector<4x256xf32> -> vector<4x256xf32>
    %4 = arith.subf %1, %3 : vector<4x256xf32>
    %5 = arith.mulf %4, %4 : vector<4x256xf32>
    %cst_4 = arith.constant dense<0.000000e+00> : vector<4x256xf32>
    %6 = tpu.matmul %5, %2, %cst_4 {dimension_numbers = #tpu.dot_dimension_numbers<[1], [0], [0], [1], [0, 0, 1, 1], [], []>} : vector<4x256xf32>, vector<256x256xf32>, vector<4x256xf32> -> vector<4x256xf32>
    %cst_5 = arith.constant 9.99999974E-6 : f32
    %7 = vector.broadcast %cst_5 : f32 to vector<4x256xf32>
    %8 = arith.addf %6, %7 : vector<4x256xf32>
    %9 = math.rsqrt %8 : vector<4x256xf32>
    %10 = arith.mulf %4, %9 : vector<4x256xf32>
    %c0_6 = arith.constant 0 : index
    %c0_7 = arith.constant 0 : index
    %11 = vector.load %arg3[%c0_6, %c0_7] : memref<1x256xf32, #tpu.memory_space<vmem>>, vector<1x256xf32>
    %12 = vector.broadcast %11 : vector<1x256xf32> to vector<4x256xf32>
    %13 = arith.mulf %10, %12 : vector<4x256xf32>
    %c0_8 = arith.constant 0 : index
    %c0_9 = arith.constant 0 : index
    %14 = vector.load %arg4[%c0_8, %c0_9] : memref<1x256xf32, #tpu.memory_space<vmem>>, vector<1x256xf32>
    %15 = vector.broadcast %14 : vector<1x256xf32> to vector<4x256xf32>
    %16 = arith.addf %13, %15 : vector<4x256xf32>
    %c0_10 = arith.constant 0 : index
    %c0_11 = arith.constant 0 : index
    %17 = vector.load %arg5[%c0_10, %c0_11] : memref<4x4xf32, #tpu.memory_space<vmem>>, vector<4x4xf32>
    %cst_12 = arith.constant dense<0.000000e+00> : vector<4x256xf32>
    %18 = tpu.matmul %17, %16, %cst_12 {dimension_numbers = #tpu.dot_dimension_numbers<[1], [0], [0], [1], [0, 0, 1, 1], [], []>} : vector<4x4xf32>, vector<4x256xf32>, vector<4x256xf32> -> vector<4x256xf32>
    %c0_13 = arith.constant 0 : index
    %c0_14 = arith.constant 0 : index
    %19 = vector.load %arg6[%c0_13, %c0_14] : memref<4x1xf32, #tpu.memory_space<vmem>>, vector<4x1xf32>
    %20 = vector.broadcast %19 : vector<4x1xf32> to vector<4x256xf32>
    %21 = arith.addf %18, %20 : vector<4x256xf32>
    %cst_15 = arith.constant dense<0xFF800000> : vector<256xf32>
    %22 = vector.multi_reduction <maximumf>, %21, %cst_15 [0] : vector<4x256xf32> to vector<256xf32>
    %23 = vector.shape_cast %22 : vector<256xf32> to vector<1x256xf32>
    %24 = vector.broadcast %23 : vector<1x256xf32> to vector<4x256xf32>
    %25 = arith.subf %21, %24 : vector<4x256xf32>
    %26 = math.exp %25 : vector<4x256xf32>
    %cst_16 = arith.constant dense<0.000000e+00> : vector<256xf32>
    %27 = vector.multi_reduction <add>, %26, %cst_16 [0] : vector<4x256xf32> to vector<256xf32>
    %28 = vector.shape_cast %27 : vector<256xf32> to vector<1x256xf32>
    %29 = vector.broadcast %28 : vector<1x256xf32> to vector<4x256xf32>
    %30 = arith.divf %26, %29 : vector<4x256xf32>
    %31 = arith.mulf %16, %30 : vector<4x256xf32>
    %c0_17 = arith.constant 0 : index
    %c0_18 = arith.constant 0 : index
    %32 = vector.load %arg7[%c0_17, %c0_18] : memref<8x4xf32, #tpu.memory_space<vmem>>, vector<8x4xf32>
    %cst_19 = arith.constant dense<0.000000e+00> : vector<8x256xf32>
    %33 = tpu.matmul %32, %31, %cst_19 {dimension_numbers = #tpu.dot_dimension_numbers<[1], [0], [0], [1], [0, 0, 1, 1], [], []>} : vector<8x4xf32>, vector<4x256xf32>, vector<8x256xf32> -> vector<8x256xf32>
    %c0_20 = arith.constant 0 : index
    %c0_21 = arith.constant 0 : index
    %34 = vector.load %arg8[%c0_20, %c0_21] : memref<8x1xf32, #tpu.memory_space<vmem>>, vector<8x1xf32>
    %35 = vector.broadcast %34 : vector<8x1xf32> to vector<8x256xf32>
    %36 = arith.addf %33, %35 : vector<8x256xf32>
    %cst_22 = arith.constant 5.000000e-01 : f32
    %37 = vector.broadcast %cst_22 : f32 to vector<8x256xf32>
    %38 = arith.mulf %37, %36 : vector<8x256xf32>
    %cst_23 = arith.constant 4.471500e-02 : f32
    %39 = vector.broadcast %cst_23 : f32 to vector<8x256xf32>
    %40 = arith.mulf %39, %36 : vector<8x256xf32>
    %41 = arith.mulf %40, %36 : vector<8x256xf32>
    %42 = arith.mulf %41, %36 : vector<8x256xf32>
    %43 = arith.addf %36, %42 : vector<8x256xf32>
    %cst_24 = arith.constant 0.797884583 : f32
    %44 = vector.broadcast %cst_24 : f32 to vector<8x256xf32>
    %45 = arith.mulf %44, %43 : vector<8x256xf32>
    %46 = math.tanh %45 : vector<8x256xf32>
    %cst_25 = arith.constant 1.000000e+00 : f32
    %47 = vector.broadcast %cst_25 : f32 to vector<8x256xf32>
    %48 = arith.addf %47, %46 : vector<8x256xf32>
    %49 = arith.mulf %38, %48 : vector<8x256xf32>
    %c0_26 = arith.constant 0 : index
    %c0_27 = arith.constant 0 : index
    %50 = vector.load %arg9[%c0_26, %c0_27] : memref<4x8xf32, #tpu.memory_space<vmem>>, vector<4x8xf32>
    %cst_28 = arith.constant dense<0.000000e+00> : vector<4x256xf32>
    %51 = tpu.matmul %50, %49, %cst_28 {dimension_numbers = #tpu.dot_dimension_numbers<[1], [0], [0], [1], [0, 0, 1, 1], [], []>} : vector<4x8xf32>, vector<8x256xf32>, vector<4x256xf32> -> vector<4x256xf32>
    %c0_29 = arith.constant 0 : index
    %c0_30 = arith.constant 0 : index
    %52 = vector.load %arg10[%c0_29, %c0_30] : memref<4x1xf32, #tpu.memory_space<vmem>>, vector<4x1xf32>
    %53 = vector.broadcast %52 : vector<4x1xf32> to vector<4x256xf32>
    %54 = arith.addf %51, %53 : vector<4x256xf32>
    %55 = arith.addf %54, %1 : vector<4x256xf32>
    %c0_31 = arith.constant 0 : index
    %c0_32 = arith.constant 0 : index
    %c0_33 = arith.constant 0 : index
    %56 = vector.load %arg11[%c0_31, %c0_32, %c0_33] : memref<1x4x256xf32, #tpu.memory_space<vmem>>, vector<1x4x256xf32>
    %57 = vector.shape_cast %56 : vector<1x4x256xf32> to vector<4x256xf32>
    %58 = vector.shape_cast %55 : vector<4x256xf32> to vector<1x4x256xf32>
    tpu.vector_store %arg11[%c0_31, %c0_32, %c0_33], %58 {strides = array<i32>} : memref<1x4x256xf32, #tpu.memory_space<vmem>>, vector<1x4x256xf32>,
    return
  }
  func.func @transform_0(%arg0: i32) -> (i32, i32, i32) {
    %c0_i32 = arith.constant 0 : i32
    %c0_i32_0 = arith.constant 0 : i32
    %c0_i32_1 = arith.constant 0 : i32
    return %arg0, %c0_i32, %c0_i32_0 : i32, i32, i32
  }
  func.func @transform_1(%arg0: i32) -> (i32, i32) {
    %c0_i32 = arith.constant 0 : i32
    %c0_i32_0 = arith.constant 0 : i32
    %c0_i32_1 = arith.constant 0 : i32
    return %c0_i32, %c0_i32_0 : i32, i32
  }
  func.func @transform_2(%arg0: i32) -> (i32, i32) {
    %c0_i32 = arith.constant 0 : i32
    %c0_i32_0 = arith.constant 0 : i32
    %c0_i32_1 = arith.constant 0 : i32
    return %c0_i32, %c0_i32_0 : i32, i32
  }
  func.func @transform_3(%arg0: i32) -> (i32, i32) {
    %c0_i32 = arith.constant 0 : i32
    %c0_i32_0 = arith.constant 0 : i32
    %c0_i32_1 = arith.constant 0 : i32
    return %c0_i32, %c0_i32_0 : i32, i32
  }
  func.func @transform_4(%arg0: i32) -> (i32, i32) {
    %c0_i32 = arith.constant 0 : i32
    %c0_i32_0 = arith.constant 0 : i32
    %c0_i32_1 = arith.constant 0 : i32
    return %c0_i32, %c0_i32_0 : i32, i32
  }
  func.func @transform_5(%arg0: i32) -> (i32, i32) {
    %c0_i32 = arith.constant 0 : i32
    %c0_i32_0 = arith.constant 0 : i32
    %c0_i32_1 = arith.constant 0 : i32
    return %c0_i32, %c0_i32_0 : i32, i32
  }
  func.func @transform_6(%arg0: i32) -> (i32, i32) {
    %c0_i32 = arith.constant 0 : i32
    %c0_i32_0 = arith.constant 0 : i32
    %c0_i32_1 = arith.constant 0 : i32
    return %c0_i32, %c0_i32_0 : i32, i32
  }
  func.func @transform_7(%arg0: i32) -> (i32, i32) {
    %c0_i32 = arith.constant 0 : i32
    %c0_i32_0 = arith.constant 0 : i32
    %c0_i32_1 = arith.constant 0 : i32
    return %c0_i32, %c0_i32_0 : i32, i32
  }
  func.func @transform_8(%arg0: i32) -> (i32, i32) {
    %c0_i32 = arith.constant 0 : i32
    %c0_i32_0 = arith.constant 0 : i32
    %c0_i32_1 = arith.constant 0 : i32
    return %c0_i32, %c0_i32_0 : i32, i32
  }
  func.func @transform_9(%arg0: i32) -> (i32, i32) {
    %c0_i32 = arith.constant 0 : i32
    %c0_i32_0 = arith.constant 0 : i32
    %c0_i32_1 = arith.constant 0 : i32
    return %c0_i32, %c0_i32_0 : i32, i32
  }
  func.func @transform_10(%arg0: i32) -> (i32, i32, i32) {
    %c0_i32 = arith.constant 0 : i32
    %c0_i32_0 = arith.constant 0 : i32
    %c0_i32_1 = arith.constant 0 : i32
    return %arg0, %c0_i32, %c0_i32_0 : i32, i32, i32
  }
}

</mosaic_0001>

<llo_original>
// kernel: tpu_custom_call.1
$region0: #{tpu_custom_call.1}
  #allocation0 [shape = 'u32[]', space=smem, size = 0x4, offset = 0x4, fixed_abs, tag = 'smem constant byte address 0x4 - core index']
  #allocation1 [shape = 'u32[144,128]{1,0:T(1,128)}', space=vmem, size = 0x12000, scoped, tag = 'internal scratch']
  %s0 = inlined_call_operand.vmem [shape: f32[2,4,256], index: 0, kind: input, shape index: {}]
  %s1 = inlined_call_operand.hbm [shape: f32[256,256], index: 1, kind: input, shape index: {}]
  %s2 = inlined_call_operand.vmem [shape: f32[1,256], index: 2, kind: input, shape index: {}]
  %s3 = inlined_call_operand.vmem [shape: f32[1,256], index: 3, kind: input, shape index: {}]
  %s4 = inlined_call_operand.vmem [shape: f32[4,4], index: 4, kind: input, shape index: {}]
  %s5 = inlined_call_operand.vmem [shape: f32[4,1], index: 5, kind: input, shape index: {}]
  %s6 = inlined_call_operand.vmem [shape: f32[8,4], index: 6, kind: input, shape index: {}]
  %s7 = inlined_call_operand.vmem [shape: f32[8,1], index: 7, kind: input, shape index: {}]
  %s8 = inlined_call_operand.vmem [shape: f32[4,8], index: 8, kind: input, shape index: {}]
  %s9 = inlined_call_operand.vmem [shape: f32[4,1], index: 9, kind: input, shape index: {}]
  %s10 = inlined_call_operand.hbm [shape: f32[2,4,256], index: 10, kind: output, shape index: {}]
  %s11 = sld [smem:[#allocation0]]
  $region77: #{tpu_custom_call.1} parent=0
    _
  %s13 = ssub.s32 1, %s11
  %s14 = scalar_select 0, %s13, %s11
  $region1: #{tpu_custom_call.1} parent=0
    #allocation2 [shape = 'u8[262144]{0}', space=vmem, size = 0x40000, scoped, tag = 'input window, operand 1, single buffered']
    #allocation3 [shape = 's32[2]{0}', space=sflag, size = 0x8, scoped, tag = 'scoped memory for tpu_custom_call.1']
    #allocation4 [shape = 's32[2]{0}', space=sflag, size = 0x8, scoped, tag = 'scoped memory for tpu_custom_call.1']
    #allocation5 [shape = 'u8[8192]{0}', space=vmem, size = 0x2000, scoped, tag = 'output window, operand 0']
    %15 = vsyncpa [#allocation3], 0
    %16 = vsyncpa [#allocation4], 0
    %s17 = scalar_lea.sflag [#allocation4], 1
    %18 = vsyncpa %s17, 0
    loop: start=0, step=1, limit=4
    $region2: #{tpu_custom_call.1} parent=1 // loop_pre_header
      _
    $region3: #{tpu_custom_call.1} parent=1 // loop_header
      %s20 = sphi 0, %s24
      %p21 = scmp.ge.s32.totalorder %s20, 4
      %s30 = sphi 0, %s32
      %s33 = sphi 0, %s30
      %s34 = sphi 0, %s33
      %s50 = sphi 0, %s34
      %s54 = sphi 0, %s54
      %s56 = sphi 0, %s54
      %s57 = sphi 0, %s56
      %s71 = sphi 0, %s57
      %s75 = sphi 0, %s75
      %s77 = sphi 0, %s75
      %s78 = sphi 0, %s77
      %s92 = sphi 0, %s78
      %s96 = sphi 0, %s96
      %s98 = sphi 0, %s96
      %s99 = sphi 0, %s98
      %s113 = sphi 0, %s99
      %s117 = sphi 0, %s117
      %s119 = sphi 0, %s117
      %s120 = sphi 0, %s119
      %s134 = sphi 0, %s120
      %s138 = sphi 0, %s138
      %s140 = sphi 0, %s138
      %s141 = sphi 0, %s140
      %s155 = sphi 0, %s141
      %s159 = sphi 0, %s159
      %s161 = sphi 0, %s159
      %s162 = sphi 0, %s161
      %s176 = sphi 0, %s162
      %s180 = sphi 0, %s180
      %s182 = sphi 0, %s180
      %s183 = sphi 0, %s182
      %s197 = sphi 0, %s183
      %s201 = sphi 0, %s201
      %s203 = sphi 0, %s201
      %s204 = sphi 0, %s203
      %s218 = sphi 0, %s204
      %s222 = sphi 0, %s222
      %s224 = sphi 0, %s222
      %s225 = sphi 0, %s224
      %s239 = sphi 0, %s225
      %s245 = sphi 0, %s247
      %s248 = sphi 0, %s245
      %s249 = sphi 0, %s248
      %s265 = sphi 0, %s249
    $region4: #{tpu_custom_call.1} parent=1 // loop_header_branch
      %23 = sbr.rel (%p21) target = $region8
    $region5: #{tpu_custom_call.1} parent=1 // loop_body
      %s25 = ssub.s32 %s20, 1
      %s26 = ssub.s32 %s20, 2
      %s27 = sadd.s32 %s20, 1
      %s28 = ssub.s32 %s20, %s27
      %p29 = scmp.eq.s32.totalorder %s28, 0
      %s31 = sadd.s32 %s30, 1
      %s32 = scalar_select %p29, %s30, %s31
      %p35 = pneg %p29
      %p36 = scmp.eq.s32.totalorder %s20, 1
      %p37 = por %p35, %p36
      %p38 = scmp.ne.s32.totalorder %s30, %s33
      %p39 = scmp.eq.s32.totalorder %s20, 0
      %p40 = por %p38, %p39
      %p41 = scmp.ne.s32.totalorder %s30, %s33
      %p42 = scmp.eq.s32.totalorder %s25, 1
      %p43 = por %p41, %p42
      %p44 = scmp.ne.s32.totalorder %s33, %s34
      %p45 = scmp.eq.s32.totalorder %s25, 0
      %p46 = por %p44, %p45
      %p47 = scmp.ne.s32.totalorder %s33, %s34
      %p48 = scmp.eq.s32.totalorder %s26, 1
      %p49 = por %p47, %p48
      %p51 = scmp.ne.s32.totalorder %s34, %s50
      %p52 = scmp.eq.s32.totalorder %s26, 0
      %p53 = por %p51, %p52
      %s55 = sadd.s32 %s54, 1
      %p58 = scmp.eq.s32.totalorder %s20, 1
      %p59 = scmp.ne.s32.totalorder %s54, %s56
      %p60 = scmp.eq.s32.totalorder %s20, 0
      %p61 = por %p59, %p60
      %p62 = scmp.ne.s32.totalorder %s54, %s56
      %p63 = scmp.eq.s32.totalorder %s25, 1
      %p64 = por %p62, %p63
      %p65 = scmp.ne.s32.totalorder %s56, %s57
      %p66 = scmp.eq.s32.totalorder %s25, 0
      %p67 = por %p65, %p66
      %p68 = scmp.ne.s32.totalorder %s56, %s57
      %p69 = scmp.eq.s32.totalorder %s26, 1
      %p70 = por %p68, %p69
      %p72 = scmp.ne.s32.totalorder %s57, %s71
      %p73 = scmp.eq.s32.totalorder %s26, 0
      %p74 = por %p72, %p73
      %s76 = sadd.s32 %s75, 1
      %p79 = scmp.eq.s32.totalorder %s20, 1
      %p80 = scmp.ne.s32.totalorder %s75, %s77
      %p81 = scmp.eq.s32.totalorder %s20, 0
      %p82 = por %p80, %p81
      %p83 = scmp.ne.s32.totalorder %s75, %s77
      %p84 = scmp.eq.s32.totalorder %s25, 1
      %p85 = por %p83, %p84
      %p86 = scmp.ne.s32.totalorder %s77, %s78
      %p87 = scmp.eq.s32.totalorder %s25, 0
      %p88 = por %p86, %p87
      %p89 = scmp.ne.s32.totalorder %s77, %s78
      %p90 = scmp.eq.s32.totalorder %s26, 1
      %p91 = por %p89, %p90
      %p93 = scmp.ne.s32.totalorder %s78, %s92
      %p94 = scmp.eq.s32.totalorder %s26, 0
      %p95 = por %p93, %p94
      %s97 = sadd.s32 %s96, 1
      %p100 = scmp.eq.s32.totalorder %s20, 1
      %p101 = scmp.ne.s32.totalorder %s96, %s98
      %p102 = scmp.eq.s32.totalorder %s20, 0
      %p103 = por %p101, %p102
      %p104 = scmp.ne.s32.totalorder %s96, %s98
      %p105 = scmp.eq.s32.totalorder %s25, 1
      %p106 = por %p104, %p105
      %p107 = scmp.ne.s32.totalorder %s98, %s99
      %p108 = scmp.eq.s32.totalorder %s25, 0
      %p109 = por %p107, %p108
      %p110 = scmp.ne.s32.totalorder %s98, %s99
      %p111 = scmp.eq.s32.totalorder %s26, 1
      %p112 = por %p110, %p111
      %p114 = scmp.ne.s32.totalorder %s99, %s113
      %p115 = scmp.eq.s32.totalorder %s26, 0
      %p116 = por %p114, %p115
      %s118 = sadd.s32 %s117, 1
      %p121 = scmp.eq.s32.totalorder %s20, 1
      %p122 = scmp.ne.s32.totalorder %s117, %s119
      %p123 = scmp.eq.s32.totalorder %s20, 0
      %p124 = por %p122, %p123
      %p125 = scmp.ne.s32.totalorder %s117, %s119
      %p126 = scmp.eq.s32.totalorder %s25, 1
      %p127 = por %p125, %p126
      %p128 = scmp.ne.s32.totalorder %s119, %s120
      %p129 = scmp.eq.s32.totalorder %s25, 0
      %p130 = por %p128, %p129
      %p131 = scmp.ne.s32.totalorder %s119, %s120
      %p132 = scmp.eq.s32.totalorder %s26, 1
      %p133 = por %p131, %p132
      %p135 = scmp.ne.s32.totalorder %s120, %s134
      %p136 = scmp.eq.s32.totalorder %s26, 0
      %p137 = por %p135, %p136
      %s139 = sadd.s32 %s138, 1
      %p142 = scmp.eq.s32.totalorder %s20, 1
      %p143 = scmp.ne.s32.totalorder %s138, %s140
      %p144 = scmp.eq.s32.totalorder %s20, 0
      %p145 = por %p143, %p144
      %p146 = scmp.ne.s32.totalorder %s138, %s140
      %p147 = scmp.eq.s32.totalorder %s25, 1
      %p148 = por %p146, %p147
      %p149 = scmp.ne.s32.totalorder %s140, %s141
      %p150 = scmp.eq.s32.totalorder %s25, 0
      %p151 = por %p149, %p150
      %p152 = scmp.ne.s32.totalorder %s140, %s141
      %p153 = scmp.eq.s32.totalorder %s26, 1
      %p154 = por %p152, %p153
      %p156 = scmp.ne.s32.totalorder %s141, %s155
      %p157 = scmp.eq.s32.totalorder %s26, 0
      %p158 = por %p156, %p157
      %s160 = sadd.s32 %s159, 1
      %p163 = scmp.eq.s32.totalorder %s20, 1
      %p164 = scmp.ne.s32.totalorder %s159, %s161
      %p165 = scmp.eq.s32.totalorder %s20, 0
      %p166 = por %p164, %p165
      %p167 = scmp.ne.s32.totalorder %s159, %s161
      %p168 = scmp.eq.s32.totalorder %s25, 1
      %p169 = por %p167, %p168
      %p170 = scmp.ne.s32.totalorder %s161, %s162
      %p171 = scmp.eq.s32.totalorder %s25, 0
      %p172 = por %p170, %p171
      %p173 = scmp.ne.s32.totalorder %s161, %s162
      %p174 = scmp.eq.s32.totalorder %s26, 1
      %p175 = por %p173, %p174
      %p177 = scmp.ne.s32.totalorder %s162, %s176
      %p178 = scmp.eq.s32.totalorder %s26, 0
      %p179 = por %p177, %p178
      %s181 = sadd.s32 %s180, 1
      %p184 = scmp.eq.s32.totalorder %s20, 1
      %p185 = scmp.ne.s32.totalorder %s180, %s182
      %p186 = scmp.eq.s32.totalorder %s20, 0
      %p187 = por %p185, %p186
      %p188 = scmp.ne.s32.totalorder %s180, %s182
      %p189 = scmp.eq.s32.totalorder %s25, 1
      %p190 = por %p188, %p189
      %p191 = scmp.ne.s32.totalorder %s182, %s183
      %p192 = scmp.eq.s32.totalorder %s25, 0
      %p193 = por %p191, %p192
      %p194 = scmp.ne.s32.totalorder %s182, %s183
      %p195 = scmp.eq.s32.totalorder %s26, 1
      %p196 = por %p194, %p195
      %p198 = scmp.ne.s32.totalorder %s183, %s197
      %p199 = scmp.eq.s32.totalorder %s26, 0
      %p200 = por %p198, %p199
      %s202 = sadd.s32 %s201, 1
      %p205 = scmp.eq.s32.totalorder %s20, 1
      %p206 = scmp.ne.s32.totalorder %s201, %s203
      %p207 = scmp.eq.s32.totalorder %s20, 0
      %p208 = por %p206, %p207
      %p209 = scmp.ne.s32.totalorder %s201, %s203
      %p210 = scmp.eq.s32.totalorder %s25, 1
      %p211 = por %p209, %p210
      %p212 = scmp.ne.s32.totalorder %s203, %s204
      %p213 = scmp.eq.s32.totalorder %s25, 0
      %p214 = por %p212, %p213
      %p215 = scmp.ne.s32.totalorder %s203, %s204
      %p216 = scmp.eq.s32.totalorder %s26, 1
      %p217 = por %p215, %p216
      %p219 = scmp.ne.s32.totalorder %s204, %s218
      %p220 = scmp.eq.s32.totalorder %s26, 0
      %p221 = por %p219, %p220
      %s223 = sadd.s32 %s222, 1
      %p226 = scmp.eq.s32.totalorder %s20, 1
      %p227 = scmp.ne.s32.totalorder %s222, %s224
      %p228 = scmp.eq.s32.totalorder %s20, 0
      %p229 = por %p227, %p228
      %p230 = scmp.ne.s32.totalorder %s222, %s224
      %p231 = scmp.eq.s32.totalorder %s25, 1
      %p232 = por %p230, %p231
      %p233 = scmp.ne.s32.totalorder %s224, %s225
      %p234 = scmp.eq.s32.totalorder %s25, 0
      %p235 = por %p233, %p234
      %p236 = scmp.ne.s32.totalorder %s224, %s225
      %p237 = scmp.eq.s32.totalorder %s26, 1
      %p238 = por %p236, %p237
      %p240 = scmp.ne.s32.totalorder %s225, %s239
      %p241 = scmp.eq.s32.totalorder %s26, 0
      %p242 = por %p240, %p241
      %s243 = ssub.s32 %s20, %s27
      %p244 = scmp.eq.s32.totalorder %s243, 0
      %s246 = sadd.s32 %s245, 1
      %s247 = scalar_select %p244, %s245, %s246
      %p250 = pneg %p244
      %p251 = scmp.eq.s32.totalorder %s20, 1
      %p252 = por %p250, %p251
      %p253 = scmp.ne.s32.totalorder %s245, %s248
      %p254 = scmp.eq.s32.totalorder %s20, 0
      %p255 = por %p253, %p254
      %p256 = scmp.ne.s32.totalorder %s245, %s248
      %p257 = scmp.eq.s32.totalorder %s25, 1
      %p258 = por %p256, %p257
      %p259 = scmp.ne.s32.totalorder %s248, %s249
      %p260 = scmp.eq.s32.totalorder %s25, 0
      %p261 = por %p259, %p260
      %p262 = scmp.ne.s32.totalorder %s248, %s249
      %p263 = scmp.eq.s32.totalorder %s26, 1
      %p264 = por %p262, %p263
      %p266 = scmp.ne.s32.totalorder %s249, %s265
      %p267 = scmp.eq.s32.totalorder %s26, 0
      %p268 = por %p266, %p267
      %p269 = scmp.le.s32.totalorder 1, %s20
      %p270 = scmp.lt.s32.totalorder %s20, 3
      %p271 = pnand %p269, %p270
      %p272 = pneg %p271
      // Predicated region
      $region9: #{tpu_custom_call.1} parent=5 // pred_check
        _
      $region10: #{tpu_custom_call.1} parent=5 // pred_check_branch
        %274 = sbr.rel (%p271) target = $region12
      $region11: #{tpu_custom_call.1} parent=5 // pred_region
        %s275 = ssub.s32 %s20, 1
        // Predicated region
        $region13: #{tpu_custom_call.1} parent=11 // pred_check
          %p276 = pneg %p67
        $region14: #{tpu_custom_call.1} parent=11 // pred_check_branch
          %278 = sbr.rel (%p276) target = $region16
        $region15: #{tpu_custom_call.1} parent=11 // pred_region
          %s280 = ssub.s32 8192, 8192
          %281 = vsyncadd [#allocation3], %s280
          %s282 = sshll.u32 [#allocation2], 4
          %s283 = int_to_ptr.vmem [resolvable:$true] %s282
          %288 = dma.hbm_to_vmem [thread:$0]  %s1, 8192, %s283, [#allocation3], 256, 256, 16
        $region16: #{tpu_custom_call.1} parent=11 // pred_fallthru
          _
        // Predicated region
        $region17: #{tpu_custom_call.1} parent=11 // pred_check
          %p289 = pneg %p88
        $region18: #{tpu_custom_call.1} parent=11 // pred_check_branch
          %291 = sbr.rel (%p289) target = $region20
        $region19: #{tpu_custom_call.1} parent=11 // pred_region
          _
        $region20: #{tpu_custom_call.1} parent=11 // pred_fallthru
          _
        // Predicated region
        $region21: #{tpu_custom_call.1} parent=11 // pred_check
          %p292 = pneg %p109
        $region22: #{tpu_custom_call.1} parent=11 // pred_check_branch
          %294 = sbr.rel (%p292) target = $region24
        $region23: #{tpu_custom_call.1} parent=11 // pred_region
          _
        $region24: #{tpu_custom_call.1} parent=11 // pred_fallthru
          _
        // Predicated region
        $region25: #{tpu_custom_call.1} parent=11 // pred_check
          %p295 = pneg %p130
        $region26: #{tpu_custom_call.1} parent=11 // pred_check_branch
          %297 = sbr.rel (%p295) target = $region28
        $region27: #{tpu_custom_call.1} parent=11 // pred_region
          _
        $region28: #{tpu_custom_call.1} parent=11 // pred_fallthru
          _
        // Predicated region
        $region29: #{tpu_custom_call.1} parent=11 // pred_check
          %p298 = pneg %p151
        $region30: #{tpu_custom_call.1} parent=11 // pred_check_branch
          %300 = sbr.rel (%p298) target = $region32
        $region31: #{tpu_custom_call.1} parent=11 // pred_region
          _
        $region32: #{tpu_custom_call.1} parent=11 // pred_fallthru
          _
        // Predicated region
        $region33: #{tpu_custom_call.1} parent=11 // pred_check
          %p301 = pneg %p172
        $region34: #{tpu_custom_call.1} parent=11 // pred_check_branch
          %303 = sbr.rel (%p301) target = $region36
        $region35: #{tpu_custom_call.1} parent=11 // pred_region
          _
        $region36: #{tpu_custom_call.1} parent=11 // pred_fallthru
          _
        // Predicated region
        $region37: #{tpu_custom_call.1} parent=11 // pred_check
          %p304 = pneg %p193
        $region38: #{tpu_custom_call.1} parent=11 // pred_check_branch
          %306 = sbr.rel (%p304) target = $region40
        $region39: #{tpu_custom_call.1} parent=11 // pred_region
          _
        $region40: #{tpu_custom_call.1} parent=11 // pred_fallthru
          _
        // Predicated region
        $region41: #{tpu_custom_call.1} parent=11 // pred_check
          %p307 = pneg %p214
        $region42: #{tpu_custom_call.1} parent=11 // pred_check_branch
          %309 = sbr.rel (%p307) target = $region44
        $region43: #{tpu_custom_call.1} parent=11 // pred_region
          _
        $region44: #{tpu_custom_call.1} parent=11 // pred_fallthru
          _
        // Predicated region
        $region45: #{tpu_custom_call.1} parent=11 // pred_check
          %p310 = pneg %p235
        $region46: #{tpu_custom_call.1} parent=11 // pred_check_branch
          %312 = sbr.rel (%p310) target = $region48
        $region47: #{tpu_custom_call.1} parent=11 // pred_region
          _
        $region48: #{tpu_custom_call.1} parent=11 // pred_fallthru
          _
      $region12: #{tpu_custom_call.1} parent=5 // pred_fallthru
        _
      %p313 = scmp.lt.s32.totalorder %s20, 2
      // Predicated region
      $region49: #{tpu_custom_call.1} parent=5 // pred_check
        %p314 = pneg %p313
      $region50: #{tpu_custom_call.1} parent=5 // pred_check_branch
        %316 = sbr.rel (%p314) target = $region52
      $region51: #{tpu_custom_call.1} parent=5 // pred_region
        // Predicated region
        $region53: #{tpu_custom_call.1} parent=51 // pred_check
          %p317 = pneg %p40
        $region54: #{tpu_custom_call.1} parent=51 // pred_check_branch
          %319 = sbr.rel (%p317) target = $region56
        $region55: #{tpu_custom_call.1} parent=51 // pred_region
          %p320 = scmp.lt.s32.totalorder %s20, 1
          %s321 = scalar_select %p320, %s20, 1
          %s322 = smul.addr %s321, 2
          %s323 = smul.addr %s322, 4
          %s324 = scalar_lea.vmem %s0, %s323
        $region56: #{tpu_custom_call.1} parent=51 // pred_fallthru
          _
      $region52: #{tpu_custom_call.1} parent=5 // pred_fallthru
        _
      %p325 = scmp.le.s32.totalorder 1, %s20
      %p326 = scmp.lt.s32.totalorder %s20, 3
      %p327 = pnand %p325, %p326
      %p328 = pneg %p327
      // Predicated region
      $region57: #{tpu_custom_call.1} parent=5 // pred_check
        _
      $region58: #{tpu_custom_call.1} parent=5 // pred_check_branch
        %330 = sbr.rel (%p327) target = $region60
      $region59: #{tpu_custom_call.1} parent=5 // pred_region
        %s331 = ssub.s32 %s20, 1
        // Predicated region
        $region61: #{tpu_custom_call.1} parent=59 // pred_check
          %p332 = pneg %p67
        $region62: #{tpu_custom_call.1} parent=59 // pred_check_branch
          %334 = sbr.rel (%p332) target = $region64
        $region63: #{tpu_custom_call.1} parent=59 // pred_region
          %335 = dma.done [#allocation3], 8192
        $region64: #{tpu_custom_call.1} parent=59 // pred_fallthru
          _
        %p336 = scmp.lt.s32.totalorder %s25, 1
        %s337 = scalar_select %p336, %s25, 1
        %s338 = smul.addr %s337, 2
        %s339 = smul.addr %s338, 4
        %s340 = scalar_lea.vmem %s0, %s339
        %p341 = pneg %p46
        %p342 = pneg %p43
        %p343 = pneg %p67
        %p344 = pneg %p64
        %p345 = pneg %p88
        %p346 = pneg %p85
        %p347 = pneg %p109
        %p348 = pneg %p106
        %p349 = pneg %p130
        %p350 = pneg %p127
        %p351 = pneg %p151
        %p352 = pneg %p148
        %p353 = pneg %p172
        %p354 = pneg %p169
        %p355 = pneg %p193
        %p356 = pneg %p190
        %p357 = pneg %p214
        %p358 = pneg %p211
        %p359 = pneg %p235
        %p360 = pneg %p232
        %p361 = pneg %p261
        %p362 = pneg %p258
        %s363 = sand.u32 %s248, 1
        %s364 = scalar_lea.sflag [#allocation4], %s363
        %s365 = sand.u32 %s248, 1
        %s366 = smul.addr %s365, 8
        %s367 = scalar_lea.vmem [#allocation5], %s366
        %p368 = scmp.lt.s32.totalorder %s25, 1
        %s369 = scalar_select %p368, %s25, 1
        %s370 = smul.addr %s369, 2
        %s371 = smul.addr %s370, 4
        %s372 = scalar_lea.vmem %s0, %s371
        %v373 = vld [vmem:[%s372] sm:$0xff]
        %v374 = vld [vmem:[#allocation2] sm:$0xff]
        %v375 = vld [vmem:[#allocation2 + $0x8] sm:$0xff]
        %v376 = vld [vmem:[#allocation2 + $0x10] sm:$0xff]
        %v377 = vld [vmem:[#allocation2 + $0x18] sm:$0xff]
        %v378 = vld [vmem:[#allocation2 + $0x20] sm:$0xff]
        %v379 = vld [vmem:[#allocation2 + $0x28] sm:$0xff]
        %v380 = vld [vmem:[#allocation2 + $0x30] sm:$0xff]
        %v381 = vld [vmem:[#allocation2 + $0x38] sm:$0xff]
        %v382 = vld [vmem:[#allocation2 + $0x40] sm:$0xff]
        %v383 = vld [vmem:[#allocation2 + $0x48] sm:$0xff]
        %v384 = vld [vmem:[#allocation2 + $0x50] sm:$0xff]
        %v385 = vld [vmem:[#allocation2 + $0x58] sm:$0xff]
        %v386 = vld [vmem:[#allocation2 + $0x60] sm:$0xff]
        %v387 = vld [vmem:[#allocation2 + $0x68] sm:$0xff]
        %v388 = vld [vmem:[#allocation2 + $0x70] sm:$0xff]
        %v389 = vld [vmem:[#allocation2 + $0x78] sm:$0xff]
        %v390 = vld [vmem:[#allocation2 + $0x80] sm:$0xff]
        %v391 = vld [vmem:[#allocation2 + $0x88] sm:$0xff]
        %v392 = vld [vmem:[#allocation2 + $0x90] sm:$0xff]
        %v393 = vld [vmem:[#allocation2 + $0x98] sm:$0xff]
        %v394 = vld [vmem:[#allocation2 + $0xa0] sm:$0xff]
        %v395 = vld [vmem:[#allocation2 + $0xa8] sm:$0xff]
        %v396 = vld [vmem:[#allocation2 + $0xb0] sm:$0xff]
        %v397 = vld [vmem:[#allocation2 + $0xb8] sm:$0xff]
        %v398 = vld [vmem:[#allocation2 + $0xc0] sm:$0xff]
        %v399 = vld [vmem:[#allocation2 + $0xc8] sm:$0xff]
        %v400 = vld [vmem:[#allocation2 + $0xd0] sm:$0xff]
        %v401 = vld [vmem:[#allocation2 + $0xd8] sm:$0xff]
        %v402 = vld [vmem:[#allocation2 + $0xe0] sm:$0xff]
        %v403 = vld [vmem:[#allocation2 + $0xe8] sm:$0xff]
        %v404 = vld [vmem:[#allocation2 + $0xf0] sm:$0xff]
        %v405 = vld [vmem:[#allocation2 + $0xf8] sm:$0xff]
        %v406 = vld [vmem:[#allocation2 + $0x100] sm:$0xff]
        %v407 = vld [vmem:[#allocation2 + $0x108] sm:$0xff]
        %v408 = vld [vmem:[#allocation2 + $0x110] sm:$0xff]
        %v409 = vld [vmem:[#allocation2 + $0x118] sm:$0xff]
        %v410 = vld [vmem:[#allocation2 + $0x120] sm:$0xff]
        %v411 = vld [vmem:[#allocation2 + $0x128] sm:$0xff]
        %v412 = vld [vmem:[#allocation2 + $0x130] sm:$0xff]
        %v413 = vld [vmem:[#allocation2 + $0x138] sm:$0xff]
        %v414 = vld [vmem:[#allocation2 + $0x140] sm:$0xff]
        %v415 = vld [vmem:[#allocation2 + $0x148] sm:$0xff]
        %v416 = vld [vmem:[#allocation2 + $0x150] sm:$0xff]
        %v417 = vld [vmem:[#allocation2 + $0x158] sm:$0xff]
        %v418 = vld [vmem:[#allocation2 + $0x160] sm:$0xff]
        %v419 = vld [vmem:[#allocation2 + $0x168] sm:$0xff]
        %v420 = vld [vmem:[#allocation2 + $0x170] sm:$0xff]
        %v421 = vld [vmem:[#allocation2 + $0x178] sm:$0xff]
        %v422 = vld [vmem:[#allocation2 + $0x180] sm:$0xff]
        %v423 = vld [vmem:[#allocation2 + $0x188] sm:$0xff]
        %v424 = vld [vmem:[#allocation2 + $0x190] sm:$0xff]
        %v425 = vld [vmem:[#allocation2 + $0x198] sm:$0xff]
        %v426 = vld [vmem:[#allocation2 + $0x1a0] sm:$0xff]
        %v427 = vld [vmem:[#allocation2 + $0x1a8] sm:$0xff]
        %v428 = vld [vmem:[#allocation2 + $0x1b0] sm:$0xff]
        %v429 = vld [vmem:[#allocation2 + $0x1b8] sm:$0xff]
        %v430 = vld [vmem:[#allocation2 + $0x1c0] sm:$0xff]
        %v431 = vld [vmem:[#allocation2 + $0x1c8] sm:$0xff]
        %v432 = vld [vmem:[#allocation2 + $0x1d0] sm:$0xff]
        %v433 = vld [vmem:[#allocation2 + $0x1d8] sm:$0xff]
        %v434 = vld [vmem:[#allocation2 + $0x1e0] sm:$0xff]
        %v435 = vld [vmem:[#allocation2 + $0x1e8] sm:$0xff]
        %v436 = vld [vmem:[#allocation2 + $0x1f0] sm:$0xff]
        %v437 = vld [vmem:[#allocation2 + $0x1f8] sm:$0xff]
        %v439 = vcombine.high %v373, %v373
        %441 = vmatprep.subr.mxu0 %v375
        %442 = vmatpush1.msra.mxu0 %v374
        %443 = vmatprep.subr.mxu0 %v377
        %444 = vmatpush1.msra.mxu0 %v376
        %445 = vmatprep.subr.mxu0 %v379
        %446 = vmatpush1.msra.mxu0 %v378
        %447 = vmatprep.subr.mxu0 %v381
        %448 = vmatpush1.msra.mxu0 %v380
        %449 = vmatprep.subr.mxu0 %v383
        %450 = vmatpush1.msra.mxu0 %v382
        %451 = vmatprep.subr.mxu0 %v385
        %452 = vmatpush1.msra.mxu0 %v384
        %453 = vmatprep.subr.mxu0 %v387
        %454 = vmatpush1.msra.mxu0 %v386
        %455 = vmatprep.subr.mxu0 %v389
        %456 = vmatpush1.msra.mxu0 %v388
        %457 = vmatprep.subr.mxu0 %v391
        %458 = vmatpush1.msra.mxu0 %v390
        %459 = vmatprep.subr.mxu0 %v393
        %460 = vmatpush1.msra.mxu0 %v392
        %461 = vmatprep.subr.mxu0 %v395
        %462 = vmatpush1.msra.mxu0 %v394
        %463 = vmatprep.subr.mxu0 %v397
        %464 = vmatpush1.msra.mxu0 %v396
        %465 = vmatprep.subr.mxu0 %v399
        %466 = vmatpush1.msra.mxu0 %v398
        %467 = vmatprep.subr.mxu0 %v401
        %468 = vmatpush1.msra.mxu0 %v400
        %469 = vmatprep.subr.mxu0 %v403
        %470 = vmatpush1.msra.mxu0 %v402
        %471 = vmatprep.subr.mxu0 %v405
        %472 = vmatpush1.msra.mxu0 %v404
        %473 = vmatprep.subr.mxu0 %v407
        %474 = vmatpush1.msra.mxu0 %v406
        %475 = vmatprep.subr.mxu0 %v409
        %476 = vmatpush1.msra.mxu0 %v408
        %477 = vmatprep.subr.mxu0 %v411
        %478 = vmatpush1.msra.mxu0 %v410
        %479 = vmatprep.subr.mxu0 %v413
        %480 = vmatpush1.msra.mxu0 %v412
        %481 = vmatprep.subr.mxu0 %v415
        %482 = vmatpush1.msra.mxu0 %v414
        %483 = vmatprep.subr.mxu0 %v417
        %484 = vmatpush1.msra.mxu0 %v416
        %485 = vmatprep.subr.mxu0 %v419
        %486 = vmatpush1.msra.mxu0 %v418
        %487 = vmatprep.subr.mxu0 %v421
        %488 = vmatpush1.msra.mxu0 %v420
        %489 = vmatprep.subr.mxu0 %v423
        %490 = vmatpush1.msra.mxu0 %v422
        %491 = vmatprep.subr.mxu0 %v425
        %492 = vmatpush1.msra.mxu0 %v424
        %493 = vmatprep.subr.mxu0 %v427
        %494 = vmatpush1.msra.mxu0 %v426
        %495 = vmatprep.subr.mxu0 %v429
        %496 = vmatpush1.msra.mxu0 %v428
        %497 = vmatprep.subr.mxu0 %v431
        %498 = vmatpush1.msra.mxu0 %v430
        %499 = vmatprep.subr.mxu0 %v433
        %500 = vmatpush1.msra.mxu0 %v432
        %501 = vmatprep.subr.mxu0 %v435
        %502 = vmatpush1.msra.mxu0 %v434
        %503 = vmatprep.subr.mxu0 %v437
        %504 = vmatpush1.msra.mxu0 %v436
        %505 = vmatprep.mubr.f32.mxu0 %v439
        %506 = vmatmul.mubr.f32.gmra.mrb[0].mxu0 %v373
        %v507 = vpop.f32.mrb[0].mxu0
        %v508 = vadd.f32 0.0, %v507
        %v509 = vpop.f32.mrb[0].mxu0
        %v510 = vadd.f32 0.0, %v509
        %511 = vdwg.mxu0
        %v514 = vcombine.low %v508, %v510
        %v516 = vsub.f32 %v373, %v514
        %v517 = vmul.f32 %v516, %v516
        %v519 = vcombine.high %v517, %v517
        %521 = vmatprep.subr.mxu0 %v375
        %522 = vmatpush1.msra.mxu0 %v374
        %523 = vmatprep.subr.mxu0 %v377
        %524 = vmatpush1.msra.mxu0 %v376
        %525 = vmatprep.subr.mxu0 %v379
        %526 = vmatpush1.msra.mxu0 %v378
        %527 = vmatprep.subr.mxu0 %v381
        %528 = vmatpush1.msra.mxu0 %v380
        %529 = vmatprep.subr.mxu0 %v383
        %530 = vmatpush1.msra.mxu0 %v382
        %531 = vmatprep.subr.mxu0 %v385
        %532 = vmatpush1.msra.mxu0 %v384
        %533 = vmatprep.subr.mxu0 %v387
        %534 = vmatpush1.msra.mxu0 %v386
        %535 = vmatprep.subr.mxu0 %v389
        %536 = vmatpush1.msra.mxu0 %v388
        %537 = vmatprep.subr.mxu0 %v391
        %538 = vmatpush1.msra.mxu0 %v390
        %539 = vmatprep.subr.mxu0 %v393
        %540 = vmatpush1.msra.mxu0 %v392
        %541 = vmatprep.subr.mxu0 %v395
        %542 = vmatpush1.msra.mxu0 %v394
        %543 = vmatprep.subr.mxu0 %v397
        %544 = vmatpush1.msra.mxu0 %v396
        %545 = vmatprep.subr.mxu0 %v399
        %546 = vmatpush1.msra.mxu0 %v398
        %547 = vmatprep.subr.mxu0 %v401
        %548 = vmatpush1.msra.mxu0 %v400
        %549 = vmatprep.subr.mxu0 %v403
        %550 = vmatpush1.msra.mxu0 %v402
        %551 = vmatprep.subr.mxu0 %v405
        %552 = vmatpush1.msra.mxu0 %v404
        %553 = vmatprep.subr.mxu0 %v407
        %554 = vmatpush1.msra.mxu0 %v406
        %555 = vmatprep.subr.mxu0 %v409
        %556 = vmatpush1.msra.mxu0 %v408
        %557 = vmatprep.subr.mxu0 %v411
        %558 = vmatpush1.msra.mxu0 %v410
        %559 = vmatprep.subr.mxu0 %v413
        %560 = vmatpush1.msra.mxu0 %v412
        %561 = vmatprep.subr.mxu0 %v415
        %562 = vmatpush1.msra.mxu0 %v414
        %563 = vmatprep.subr.mxu0 %v417
        %564 = vmatpush1.msra.mxu0 %v416
        %565 = vmatprep.subr.mxu0 %v419
        %566 = vmatpush1.msra.mxu0 %v418
        %567 = vmatprep.subr.mxu0 %v421
        %568 = vmatpush1.msra.mxu0 %v420
        %569 = vmatprep.subr.mxu0 %v423
        %570 = vmatpush1.msra.mxu0 %v422
        %571 = vmatprep.subr.mxu0 %v425
        %572 = vmatpush1.msra.mxu0 %v424
        %573 = vmatprep.subr.mxu0 %v427
        %574 = vmatpush1.msra.mxu0 %v426
        %575 = vmatprep.subr.mxu0 %v429
        %576 = vmatpush1.msra.mxu0 %v428
        %577 = vmatprep.subr.mxu0 %v431
        %578 = vmatpush1.msra.mxu0 %v430
        %579 = vmatprep.subr.mxu0 %v433
        %580 = vmatpush1.msra.mxu0 %v432
        %581 = vmatprep.subr.mxu0 %v435
        %582 = vmatpush1.msra.mxu0 %v434
        %583 = vmatprep.subr.mxu0 %v437
        %584 = vmatpush1.msra.mxu0 %v436
        %585 = vmatprep.mubr.f32.mxu0 %v519
        %586 = vmatmul.mubr.f32.gmra.mrb[0].mxu0 %v517
        %v587 = vpop.f32.mrb[0].mxu0
        %v588 = vadd.f32 1e-05, %v587
        %v589 = vpop.f32.mrb[0].mxu0
        %v590 = vadd.f32 1e-05, %v589
        %591 = vdwg.mxu0
        %v592 = vrsqrt.pop %v588
        %v593 = vrsqrt.pop %v590
        %v596 = vcombine.low %v592, %v593
        %v598 = vmul.f32 %v516, %v596
        %v599 = vld [vmem:[%s2] sm:$0x3]
        %v601 = vlaneseq
        %v602 = vshrl.u32 %v601, 7
        %v603 = vsub.s32 0, %v602
        %v604 = vrot.slane %v599, %v603
        %v605 = vlaneseq
        %v606 = vshrl.u32 %v605, 7
        %v607 = vsub.s32 1, %v606
        %v608 = vrot.slane %v599, %v607
        %v609 = vcombine.low %v604, %v608
        %v611 = vmul.f32 %v598, %v609
        %v612 = vld [vmem:[%s3] sm:$0x3]
        %v614 = vlaneseq
        %v615 = vshrl.u32 %v614, 7
        %v616 = vsub.s32 0, %v615
        %v617 = vrot.slane %v612, %v616
        %v618 = vlaneseq
        %v619 = vshrl.u32 %v618, 7
        %v620 = vsub.s32 1, %v619
        %v621 = vrot.slane %v612, %v620
        %v622 = vcombine.low %v617, %v621
        %v624 = vadd.f32 %v611, %v622
        %v625 = vld [vmem:[%s4] sm:$0xf]
        %v626 = vld [vmem:[%s5] sm:$0xf]
        %628 = vset.pattern.permute.xlu0 0
        %629 = vperm.xlu0 %628, %v626
        %v630 = vpop.permute.xlu0 %629
        %v633 = vcombine.high %v624, %v624
        %vm634 = vcmask 31744
        %v636 = vsel %vm634, %v625, 0
        %vm638 = vcmask 1043456
        %v639 = vsel %vm638, %v624, 0
        %v641 = vsel %vm638, %v633, 0
        %643 = vmatprep.subr.mxu0 %v641
        %644 = vmatpush1.msra.mxu0 %v639
        %645 = vmatprep.subr.mxu0 0.0
        %646 = vmatpush1.msra.mxu0 0.0
        %647 = vmatprep.subr.mxu0 0.0
        %648 = vmatpush1.msra.mxu0 0.0
        %649 = vmatprep.subr.mxu0 0.0
        %650 = vmatpush1.msra.mxu0 0.0
        %651 = vmatprep.subr.mxu0 0.0
        %652 = vmatpush1.msra.mxu0 0.0
        %653 = vmatprep.subr.mxu0 0.0
        %654 = vmatpush1.msra.mxu0 0.0
        %655 = vmatprep.subr.mxu0 0.0
        %656 = vmatpush1.msra.mxu0 0.0
        %657 = vmatprep.subr.mxu0 0.0
        %658 = vmatpush1.msra.mxu0 0.0
        %659 = vmatprep.subr.mxu0 0.0
        %660 = vmatpush1.msra.mxu0 0.0
        %661 = vmatprep.subr.mxu0 0.0
        %662 = vmatpush1.msra.mxu0 0.0
        %663 = vmatprep.subr.mxu0 0.0
        %664 = vmatpush1.msra.mxu0 0.0
        %665 = vmatprep.subr.mxu0 0.0
        %666 = vmatpush1.msra.mxu0 0.0
        %667 = vmatprep.subr.mxu0 0.0
        %668 = vmatpush1.msra.mxu0 0.0
        %669 = vmatprep.subr.mxu0 0.0
        %670 = vmatpush1.msra.mxu0 0.0
        %671 = vmatprep.subr.mxu0 0.0
        %672 = vmatpush1.msra.mxu0 0.0
        %673 = vmatprep.subr.mxu0 0.0
        %674 = vmatpush1.msra.mxu0 0.0
        %675 = vmatprep.subr.mxu0 0.0
        %676 = vmatpush1.msra.mxu0 0.0
        %677 = vmatprep.subr.mxu0 0.0
        %678 = vmatpush1.msra.mxu0 0.0
        %679 = vmatprep.subr.mxu0 0.0
        %680 = vmatpush1.msra.mxu0 0.0
        %681 = vmatprep.subr.mxu0 0.0
        %682 = vmatpush1.msra.mxu0 0.0
        %683 = vmatprep.subr.mxu0 0.0
        %684 = vmatpush1.msra.mxu0 0.0
        %685 = vmatprep.subr.mxu0 0.0
        %686 = vmatpush1.msra.mxu0 0.0
        %687 = vmatprep.subr.mxu0 0.0
        %688 = vmatpush1.msra.mxu0 0.0
        %689 = vmatprep.subr.mxu0 0.0
        %690 = vmatpush1.msra.mxu0 0.0
        %691 = vmatprep.subr.mxu0 0.0
        %692 = vmatpush1.msra.mxu0 0.0
        %693 = vmatprep.subr.mxu0 0.0
        %694 = vmatpush1.msra.mxu0 0.0
        %695 = vmatprep.subr.mxu0 0.0
        %696 = vmatpush1.msra.mxu0 0.0
        %697 = vmatprep.subr.mxu0 0.0
        %698 = vmatpush1.msra.mxu0 0.0
        %699 = vmatprep.subr.mxu0 0.0
        %700 = vmatpush1.msra.mxu0 0.0
        %701 = vmatprep.subr.mxu0 0.0
        %702 = vmatpush1.msra.mxu0 0.0
        %703 = vmatprep.subr.mxu0 0.0
        %704 = vmatpush1.msra.mxu0 0.0
        %705 = vmatprep.subr.mxu0 0.0
        %706 = vmatpush1.msra.mxu0 0.0
        %707 = vmatprep.mubr.f32.mxu0 0.0
        %708 = vmatmul.mubr.f32.gmra.mrb[0].mxu0 %v636
        %v709 = vpop.f32.mrb[0].mxu0
        %v710 = vadd.f32 %v630, %v709
        %v711 = vpop.f32.mrb[0].mxu0
        %v712 = vadd.f32 %v630, %v711
        %713 = vdwg.mxu0
        %v714 = vsel %vm638, %v710, -inf
        %v715 = vrot.slane %v714, 4
        %v716 = vmax.f32 %v714, %v715
        %v717 = vrot.slane %v716, 2
        %v718 = vmax.f32 %v716, %v717
        %v719 = vrot.slane %v718, 1
        %v720 = vmax.f32 %v718, %v719
        %v721 = vsel %vm638, %v712, -inf
        %v722 = vrot.slane %v721, 4
        %v723 = vmax.f32 %v721, %v722
        %v724 = vrot.slane %v723, 2
        %v725 = vmax.f32 %v723, %v724
        %v726 = vrot.slane %v725, 1
        %v727 = vmax.f32 %v725, %v726
        %v728 = vsub.f32 %v710, %v720
        %v729 = vsub.f32 %v712, %v727
        %v730 = vmul.f32 %v728, 1.442695
        %v731 = vpow.pop %v730
        %v732 = vmul.f32 %v729, 1.442695
        %v733 = vpow.pop %v732
        %v734 = vsel %vm638, %v731, 0.0
        %v735 = vrot.slane %v734, 4
        %v736 = vadd.f32 %v734, %v735
        %v737 = vrot.slane %v736, 2
        %v738 = vadd.f32 %v736, %v737
        %v739 = vrot.slane %v738, 1
        %v740 = vadd.f32 %v738, %v739
        %v741 = vsel %vm638, %v733, 0.0
        %v742 = vrot.slane %v741, 4
        %v743 = vadd.f32 %v741, %v742
        %v744 = vrot.slane %v743, 2
        %v745 = vadd.f32 %v743, %v744
        %v746 = vrot.slane %v745, 1
        %v747 = vadd.f32 %v745, %v746
        %v748 = vrcp.pop %v740
        %v749 = vmul.f32 %v731, %v748
        %v750 = vrcp.pop %v747
        %v751 = vmul.f32 %v733, %v750
        %v754 = vcombine.low %v749, %v751
        %v756 = vmul.f32 %v624, %v754
        %v757 = vld [vmem:[%s6] sm:$0xff]
        %v758 = vld [vmem:[%s7] sm:$0xff]
        %760 = vset.pattern.permute.xlu0 0
        %761 = vperm.xlu0 %760, %v758
        %v762 = vpop.permute.xlu0 %761
        %v765 = vcombine.high %v756, %v756
        %v767 = vsel %vm634, %v757, 0
        %v769 = vsel %vm638, %v756, 0
        %v771 = vsel %vm638, %v765, 0
        %773 = vmatprep.subr.mxu0 %v771
        %774 = vmatpush1.msra.mxu0 %v769
        %775 = vmatprep.subr.mxu0 0.0
        %776 = vmatpush1.msra.mxu0 0.0
        %777 = vmatprep.subr.mxu0 0.0
        %778 = vmatpush1.msra.mxu0 0.0
        %779 = vmatprep.subr.mxu0 0.0
        %780 = vmatpush1.msra.mxu0 0.0
        %781 = vmatprep.subr.mxu0 0.0
        %782 = vmatpush1.msra.mxu0 0.0
        %783 = vmatprep.subr.mxu0 0.0
        %784 = vmatpush1.msra.mxu0 0.0
        %785 = vmatprep.subr.mxu0 0.0
        %786 = vmatpush1.msra.mxu0 0.0
        %787 = vmatprep.subr.mxu0 0.0
        %788 = vmatpush1.msra.mxu0 0.0
        %789 = vmatprep.subr.mxu0 0.0
        %790 = vmatpush1.msra.mxu0 0.0
        %791 = vmatprep.subr.mxu0 0.0
        %792 = vmatpush1.msra.mxu0 0.0
        %793 = vmatprep.subr.mxu0 0.0
        %794 = vmatpush1.msra.mxu0 0.0
        %795 = vmatprep.subr.mxu0 0.0
        %796 = vmatpush1.msra.mxu0 0.0
        %797 = vmatprep.subr.mxu0 0.0
        %798 = vmatpush1.msra.mxu0 0.0
        %799 = vmatprep.subr.mxu0 0.0
        %800 = vmatpush1.msra.mxu0 0.0
        %801 = vmatprep.subr.mxu0 0.0
        %802 = vmatpush1.msra.mxu0 0.0
        %803 = vmatprep.subr.mxu0 0.0
        %804 = vmatpush1.msra.mxu0 0.0
        %805 = vmatprep.subr.mxu0 0.0
        %806 = vmatpush1.msra.mxu0 0.0
        %807 = vmatprep.subr.mxu0 0.0
        %808 = vmatpush1.msra.mxu0 0.0
        %809 = vmatprep.subr.mxu0 0.0
        %810 = vmatpush1.msra.mxu0 0.0
        %811 = vmatprep.subr.mxu0 0.0
        %812 = vmatpush1.msra.mxu0 0.0
        %813 = vmatprep.subr.mxu0 0.0
        %814 = vmatpush1.msra.mxu0 0.0
        %815 = vmatprep.subr.mxu0 0.0
        %816 = vmatpush1.msra.mxu0 0.0
        %817 = vmatprep.subr.mxu0 0.0
        %818 = vmatpush1.msra.mxu0 0.0
        %819 = vmatprep.subr.mxu0 0.0
        %820 = vmatpush1.msra.mxu0 0.0
        %821 = vmatprep.subr.mxu0 0.0
        %822 = vmatpush1.msra.mxu0 0.0
        %823 = vmatprep.subr.mxu0 0.0
        %824 = vmatpush1.msra.mxu0 0.0
        %825 = vmatprep.subr.mxu0 0.0
        %826 = vmatpush1.msra.mxu0 0.0
        %827 = vmatprep.subr.mxu0 0.0
        %828 = vmatpush1.msra.mxu0 0.0
        %829 = vmatprep.subr.mxu0 0.0
        %830 = vmatpush1.msra.mxu0 0.0
        %831 = vmatprep.subr.mxu0 0.0
        %832 = vmatpush1.msra.mxu0 0.0
        %833 = vmatprep.subr.mxu0 0.0
        %834 = vmatpush1.msra.mxu0 0.0
        %835 = vmatprep.subr.mxu0 0.0
        %836 = vmatpush1.msra.mxu0 0.0
        %837 = vmatprep.mubr.f32.mxu0 0.0
        %838 = vmatmul.mubr.f32.gmra.mrb[0].mxu0 %v767
        %v839 = vpop.f32.mrb[0].mxu0
        %v840 = vadd.f32 %v762, %v839
        %v841 = vpop.f32.mrb[0].mxu0
        %v842 = vadd.f32 %v762, %v841
        %843 = vdwg.mxu0
        %v844 = vmul.f32 %v840, 0.5
        %v845 = vmul.f32 %v842, 0.5
        %v846 = vmul.f32 %v840, 0.044715
        %v847 = vmul.f32 %v842, 0.044715
        %v848 = vmul.f32 %v846, %v840
        %v849 = vmul.f32 %v847, %v842
        %v850 = vmul.f32 %v848, %v840
        %v851 = vmul.f32 %v849, %v842
        %v852 = vadd.f32 %v840, %v850
        %v853 = vadd.f32 %v842, %v851
        %v854 = vmul.f32 %v852, 0.7978846
        %v855 = vmul.f32 %v853, 0.7978846
        %v856 = vtanh.pop %v854
        %v857 = vtanh.pop %v855
        %v858 = vadd.f32 %v856, 1.0
        %v859 = vadd.f32 %v857, 1.0
        %v860 = vmul.f32 %v844, %v858
        %v861 = vmul.f32 %v845, %v859
        %v862 = vld [vmem:[%s8] sm:$0xf]
        %v863 = vld [vmem:[%s9] sm:$0xf]
        %865 = vset.pattern.permute.xlu0 0
        %866 = vperm.xlu0 %865, %v863
        %v867 = vpop.permute.xlu0 %866
        %vm869 = vcmask 64512
        %v871 = vsel %vm869, %v862, 0
        %873 = vmatprep.subr.mxu0 %v861
        %874 = vmatpush1.msra.mxu0 %v860
        %875 = vmatprep.subr.mxu0 0.0
        %876 = vmatpush1.msra.mxu0 0.0
        %877 = vmatprep.subr.mxu0 0.0
        %878 = vmatpush1.msra.mxu0 0.0
        %879 = vmatprep.subr.mxu0 0.0
        %880 = vmatpush1.msra.mxu0 0.0
        %881 = vmatprep.subr.mxu0 0.0
        %882 = vmatpush1.msra.mxu0 0.0
        %883 = vmatprep.subr.mxu0 0.0
        %884 = vmatpush1.msra.mxu0 0.0
        %885 = vmatprep.subr.mxu0 0.0
        %886 = vmatpush1.msra.mxu0 0.0
        %887 = vmatprep.subr.mxu0 0.0
        %888 = vmatpush1.msra.mxu0 0.0
        %889 = vmatprep.subr.mxu0 0.0
        %890 = vmatpush1.msra.mxu0 0.0
        %891 = vmatprep.subr.mxu0 0.0
        %892 = vmatpush1.msra.mxu0 0.0
        %893 = vmatprep.subr.mxu0 0.0
        %894 = vmatpush1.msra.mxu0 0.0
        %895 = vmatprep.subr.mxu0 0.0
        %896 = vmatpush1.msra.mxu0 0.0
        %897 = vmatprep.subr.mxu0 0.0
        %898 = vmatpush1.msra.mxu0 0.0
        %899 = vmatprep.subr.mxu0 0.0
        %900 = vmatpush1.msra.mxu0 0.0
        %901 = vmatprep.subr.mxu0 0.0
        %902 = vmatpush1.msra.mxu0 0.0
        %903 = vmatprep.subr.mxu0 0.0
        %904 = vmatpush1.msra.mxu0 0.0
        %905 = vmatprep.subr.mxu0 0.0
        %906 = vmatpush1.msra.mxu0 0.0
        %907 = vmatprep.subr.mxu0 0.0
        %908 = vmatpush1.msra.mxu0 0.0
        %909 = vmatprep.subr.mxu0 0.0
        %910 = vmatpush1.msra.mxu0 0.0
        %911 = vmatprep.subr.mxu0 0.0
        %912 = vmatpush1.msra.mxu0 0.0
        %913 = vmatprep.subr.mxu0 0.0
        %914 = vmatpush1.msra.mxu0 0.0
        %915 = vmatprep.subr.mxu0 0.0
        %916 = vmatpush1.msra.mxu0 0.0
        %917 = vmatprep.subr.mxu0 0.0
        %918 = vmatpush1.msra.mxu0 0.0
        %919 = vmatprep.subr.mxu0 0.0
        %920 = vmatpush1.msra.mxu0 0.0
        %921 = vmatprep.subr.mxu0 0.0
        %922 = vmatpush1.msra.mxu0 0.0
        %923 = vmatprep.subr.mxu0 0.0
        %924 = vmatpush1.msra.mxu0 0.0
        %925 = vmatprep.subr.mxu0 0.0
        %926 = vmatpush1.msra.mxu0 0.0
        %927 = vmatprep.subr.mxu0 0.0
        %928 = vmatpush1.msra.mxu0 0.0
        %929 = vmatprep.subr.mxu0 0.0
        %930 = vmatpush1.msra.mxu0 0.0
        %931 = vmatprep.subr.mxu0 0.0
        %932 = vmatpush1.msra.mxu0 0.0
        %933 = vmatprep.subr.mxu0 0.0
        %934 = vmatpush1.msra.mxu0 0.0
        %935 = vmatprep.subr.mxu0 0.0
        %936 = vmatpush1.msra.mxu0 0.0
        %937 = vmatprep.mubr.f32.mxu0 0.0
        %938 = vmatmul.mubr.f32.gmra.mrb[0].mxu0 %v871
        %v939 = vpop.f32.mrb[0].mxu0
        %v940 = vadd.f32 %v867, %v939
        %v941 = vpop.f32.mrb[0].mxu0
        %v942 = vadd.f32 %v867, %v941
        %943 = vdwg.mxu0
        %v944 = vadd.f32 %v940, %v373
        %v945 = vadd.f32 %v942, %v439
        %v948 = vcombine.low %v944, %v945
        %950 = vst [vmem:[%s367] sm:$0xff] %v948
        %s951 = sand.u32 %s248, 1
        %s952 = scalar_lea.sflag [#allocation4], %s951
        %s953 = sand.u32 %s248, 1
        %s954 = smul.addr %s953, 8
        %s955 = scalar_lea.vmem [#allocation5], %s954
        // Predicated region
        $region65: #{tpu_custom_call.1} parent=59 // pred_check
          %p956 = pneg %p258
        $region66: #{tpu_custom_call.1} parent=59 // pred_check_branch
          %958 = sbr.rel (%p956) target = $region68
        $region67: #{tpu_custom_call.1} parent=59 // pred_region
          %s960 = ssub.s32 128, 128
          %961 = vsyncadd %s952, %s960
          %s962 = smul.addr %s25, 2
          %s963 = smul.addr %s962, 64
          %s964 = scalar_lea.hbm %s10, %s963
          %s966 = sshll.u32 %s955, 4
          %s967 = int_to_ptr.vmem [resolvable:$true] %s966
          %969 = dma.vmem_to_hbm [thread:$0]  %s967, 128, %s964, %s952
        $region68: #{tpu_custom_call.1} parent=59 // pred_fallthru
          _
      $region60: #{tpu_custom_call.1} parent=5 // pred_fallthru
        _
      %p970 = scmp.le.s32.totalorder 2, %s20
      // Predicated region
      $region69: #{tpu_custom_call.1} parent=5 // pred_check
        %p971 = pneg %p970
      $region70: #{tpu_custom_call.1} parent=5 // pred_check_branch
        %973 = sbr.rel (%p971) target = $region72
      $region71: #{tpu_custom_call.1} parent=5 // pred_region
        %s974 = ssub.s32 %s20, 2
        // Predicated region
        $region73: #{tpu_custom_call.1} parent=71 // pred_check
          %p975 = pneg %p264
        $region74: #{tpu_custom_call.1} parent=71 // pred_check_branch
          %977 = sbr.rel (%p975) target = $region76
        $region75: #{tpu_custom_call.1} parent=71 // pred_region
          %s978 = sand.u32 %s249, 1
          %s979 = scalar_lea.sflag [#allocation4], %s978
          %s980 = sand.u32 %s249, 1
          %s981 = smul.addr %s980, 8
          %s982 = scalar_lea.vmem [#allocation5], %s981
          %983 = dma.done %s979, 128
        $region76: #{tpu_custom_call.1} parent=71 // pred_fallthru
          _
      $region72: #{tpu_custom_call.1} parent=5 // pred_fallthru
        _
    $region6: #{tpu_custom_call.1} parent=1 // loop_footer
      %s24 = sadd.s32 1, %s20
    $region7: #{tpu_custom_call.1} parent=1 // loop_footer_branch
      %19 = sbr.rel target = $region3
    $region8: #{tpu_custom_call.1} parent=1 // loop_exit
      _
    %984 = vsyncpa [#allocation3], 1
    %s985 = scalar_lea.sflag [#allocation3], 1
    %986 = vsyncpa %s985, 1
    %987 = vsyncpa [#allocation4], 1
    %s988 = scalar_lea.sflag [#allocation4], 1
    %989 = vsyncpa %s988, 1

</llo_original>
